<compile_context>
chip_gen: v7x
topology: tpu7x:2x2x1
jax: 0.10.0
libtpu: 0.0.40
codegen_flags: <defaults>
</compile_context>

<pallas_src>
import jax
import jax.numpy as jnp
from jax import lax
from jax.experimental import pallas as pl
from jax.experimental.pallas import tpu as pltpu


def _dot(a, b):
    return jnp.dot(a, b, preferred_element_type=jnp.float32)


def _round_up(x, m):
    return ((x + m - 1) // m) * m


def _vmem_budget_bytes():
    """Per-core VMEM budget with >=25% headroom for compiler scratch."""
    cap = 64 << 20                      # conservative default: v7x per-TC VMEM
    try:
        info = pltpu.get_tpu_info()
        got = getattr(info, "vmem_capacity_bytes", None)
        if got:
            cap = int(got)
    except Exception:
        pass
    cap = max(32 << 20, min(cap, 128 << 20))
    return (cap * 3) // 4               # 48 MiB (v7x) / 96 MiB (v5e, v6e)


def _k2_vmem_bytes(vt, v_cols, C, H):
    """VMEM estimate for kernel 2 (double-buffered streamed tiles + residents)."""
    grad = 2 * (2 * vt * v_cols * 2)        # gradX + gradY bf16 row tiles
    xd = 2 * (v_cols * C * 2)               # x_diffuse bf16, resident per batch
    xio = 2 * (vt * C * 4) * 2              # x-in f32 tile + out f32 tile
    w = 2 * ((2 * C * C + 3 * C * H + H * C) * 2 + (H + C) * 4)   # bf16 W, f32 b
    return grad + xd + xio + w


def _choose_row_tile(v_rows, C, H, requested, budget):
    """Largest multiple-of-16 row tile <= requested that fits the VMEM budget."""
    vt = min(requested, _round_up(v_rows, 16))
    vt = max(16, (vt // 16) * 16)           # bf16 sublane packing => multiple of 16
    while vt > 16:
        v_pad = _round_up(v_rows, vt)
        if _k2_vmem_bytes(vt, v_pad, C, H) <= budget:
            break
        vt = max(16, (vt // 2 // 16) * 16)
    return vt


# ----------------------------------------------------------------------------
# Kernel 1: LearnedTimeDiffusion (spectral), one batch element per grid step.
# ----------------------------------------------------------------------------
def diffusion_kernel(
    x_ref,        # (1, Vp, C)  f32
    mass_ref,     # (1, Vp, 1)  f32
    evals_ref,    # (1, K, 1)   f32
    evecs_ref,    # (1, Vp, K)  f32
    time_ref,     # (1, C)      f32 learned per-channel diffusion time
    xd_ref,       # (1, Vp, C)  bf16 output: x_diffuse
):
    x = x_ref[0]             # (Vp, C)
    mass = mass_ref[0]       # (Vp, 1)
    evals = evals_ref[0]     # (K, 1)
    ev = evecs_ref[0]        # (Vp, K)

    time = jnp.maximum(time_ref[...], 1e-8)          # torch.clamp(t, min=1e-8)

    mx = x * mass
    # to_basis: evecs^T @ (mass * x) as a transposed-LHS contraction so evecs
    # is only DMA'd once (no separate evecsT input / HBM transpose copy).
    x_spec = lax.dot_general(ev, mx, (((0,), (0,)), ((), ())),
                             preferred_element_type=jnp.float32)    # (K, C)
    coefs = jnp.exp(-evals * time)                                  # (K, C)
    x_diffuse = _dot(ev, coefs * x_spec)                            # (Vp, C)

    xd_ref[0] = x_diffuse.astype(xd_ref.dtype)                      # bf16 out


# ----------------------------------------------------------------------------
# Kernel 2: gradient features + MiniMLP + residual, row-tiled over vertices.
# ----------------------------------------------------------------------------
def block_row_kernel(
    x_ref,        # (1, Vt, C)   f32 input features, row tile
    xd_ref,       # (1, Vp, C)   bf16 x_diffuse, full (resident across row axis)
    gx_ref,       # (1, Vt, Vp)  bf16 gradX row tile
    gy_ref,       # (1, Vt, Vp)  bf16 gradY row tile
    a_re_ref,     # (C, C)       bf16 A_re^T
    a_im_ref,     # (C, C)       bf16 A_im^T
    w1x_ref,      # (C, H)       bf16 W1^T slab acting on x_in
    w1d_ref,      # (C, H)       bf16 W1^T slab acting on x_diffuse
    w1g_ref,      # (C, H)       bf16 W1^T slab acting on gradient features
    b1_ref,       # (1, H)       f32
    w2_ref,       # (H, C)       bf16 W2^T
    b2_ref,       # (1, C)       f32
    out_ref,      # (1, Vt, C)
):
    vt = out_ref.shape[1]
    r = pl.program_id(1)
    row0 = pl.multiple_of(r * vt, vt)

    x = x_ref[0]                                        # (Vt, C) f32
    xd_full = xd_ref[0]                                 # (Vp, C) bf16 (no cast)
    gx = gx_ref[0]                                      # (Vt, Vp) bf16
    gy = gy_ref[0]                                      # (Vt, Vp) bf16

    # --- SpatialGradientFeatures (with_gradient_rotations=True) -------------
    v_re = _dot(gx, xd_full)                            # (Vt, C) f32 accum
    v_im = _dot(gy, xd_full)                            # (Vt, C) f32 accum
    v_re_bf = v_re.astype(jnp.bfloat16)
    v_im_bf = v_im.astype(jnp.bfloat16)
    a_re = a_re_ref[...]
    a_im = a_im_ref[...]
    b_re = _dot(v_re_bf, a_re) - _dot(v_im_bf, a_im)
    b_im = _dot(v_im_bf, a_re) + _dot(v_re_bf, a_im)
    gfeat = jnp.tanh(v_re * b_re + v_im * b_im)         # (Vt, C) f32

    # --- MiniMLP ([3C, H, C]) as split matmuls (no concat relayout) ---------
    xd_tile = xd_ref.at[0][pl.ds(row0, vt), :]          # (Vt, C) bf16 row tile
    h = (_dot(x.astype(jnp.bfloat16), w1x_ref[...])
         + _dot(xd_tile, w1d_ref[...])
         + _dot(gfeat.astype(jnp.bfloat16), w1g_ref[...])
         + b1_ref[...])
    h = jnp.maximum(h, 0.0)                             # ReLU
    # TODO(synk): nn.Dropout(p=0.5) is evaluated in eval mode (identity).
    y = _dot(h.astype(jnp.bfloat16), w2_ref[...]) + b2_ref[...]

    out_ref[0] = (y + x).astype(out_ref.dtype)          # residual


# ----------------------------------------------------------------------------
# One-time per-mesh operator preparation (reused across every DiffusionNet block).
# ----------------------------------------------------------------------------
def prepare_mesh_operators(mass, evals, evecs, gradX, gradY, *,
                           c_width=128, mlp_hidden=128, row_tile=256):
    """Chooses the row tile against the VMEM budget, zero-pads V up to a
    multiple of it, and casts gradX/gradY to bf16 ONCE (amortized over blocks)."""
    B, V, K = evecs.shape
    budget = _vmem_budget_bytes()
    vt = _choose_row_tile(V, c_width, mlp_hidden, row_tile, budget)
    v_pad = _round_up(V, vt)
    pad = v_pad - V
    if pad:
        # Padded rows/cols are zero -> zero contribution to real rows; padded
        # output rows are sliced off in the block wrapper.
        gradX = jnp.pad(gradX, ((0, 0), (0, pad), (0, pad)))
        gradY = jnp.pad(gradY, ((0, 0), (0, pad), (0, pad)))
        mass = jnp.pad(mass, ((0, 0), (0, pad)), constant_values=1.0)
        evecs = jnp.pad(evecs, ((0, 0), (0, pad), (0, 0)))
    return {
        "mass3": mass[..., None].astype(jnp.float32),      # (B, Vp, 1)
        "evals3": evals[..., None].astype(jnp.float32),    # (B, K, 1)
        "evecs": evecs.astype(jnp.float32),                # (B, Vp, K)
        "gradX_bf": gradX.astype(jnp.bfloat16),            # (B, Vp, Vp)
        "gradY_bf": gradY.astype(jnp.bfloat16),            # (B, Vp, Vp)
        "row_tile": vt,
        "v_pad": v_pad,
        "v_orig": V,
    }


# ----------------------------------------------------------------------------
# DiffusionNetBlock forward.
# ----------------------------------------------------------------------------
def diffusion_net_block(x_in, ops, params):
    """x_in: (B, V, C). ops: from prepare_mesh_operators. params: block weights."""
    B, V, C = x_in.shape
    assert V == ops["v_orig"], "x_in vertex count does not match prepared operators"
    vt = ops["row_tile"]
    v_pad = ops["v_pad"]
    K = ops["evals3"].shape[1]
    H = params["b1"].shape[0]
    n_rows = v_pad // vt
    budget = _vmem_budget_bytes()

    # --- plain-JAX glue: padding, weight pre-split / bf16 cast ---------------
    x_p = jnp.pad(x_in, ((0, 0), (0, v_pad - V), (0, 0))) if v_pad > V else x_in

    time2d = params["time"][None, :].astype(jnp.float32)       # (1, C)
    a_re_t = params["A_re"].T.astype(jnp.bfloat16)             # (C, C)
    a_im_t = params["A_im"].T.astype(jnp.bfloat16)             # (C, C)
    w1_t = params["W1"].T.astype(jnp.bfloat16)                 # (3C, H)
    w1x, w1d, w1g = w1_t[:C], w1_t[C:2 * C], w1_t[2 * C:]
    b1_2d = params["b1"][None, :].astype(jnp.float32)          # (1, H)
    w2_t = params["W2"].T.astype(jnp.bfloat16)                 # (H, C)
    b2_2d = params["b2"][None, :].astype(jnp.float32)          # (1, C)

    # --- Kernel 1: diffusion -> x_diffuse (B, Vp, C) bf16 ---------------------
    # TODO(synk): for extremely large V this kernel could itself be row-tiled;
    # at O(V*K*C) it is cheap next to the V^2 gradient matmuls below.
    k1_est = 2 * (v_pad * C * 4 + v_pad * C * 2 + v_pad * K * 4
                  + v_pad * 4 + K * 4 + C * 4)
    k1_limit = int(min(budget, max(k1_est + (8 << 20), 16 << 20)))
    x_diffuse = pl.pallas_call(
        diffusion_kernel,
        out_shape=jax.ShapeDtypeStruct((B, v_pad, C), jnp.bfloat16),
        grid=(B,),
        in_specs=[
            pl.BlockSpec((1, v_pad, C), lambda b: (b, 0, 0)),
            pl.BlockSpec((1, v_pad, 1), lambda b: (b, 0, 0)),
            pl.BlockSpec((1, K, 1), lambda b: (b, 0, 0)),
            pl.BlockSpec((1, v_pad, K), lambda b: (b, 0, 0)),
            pl.BlockSpec((1, C), lambda b: (0, 0)),
        ],
        out_specs=pl.BlockSpec((1, v_pad, C), lambda b: (b, 0, 0)),
        compiler_params=pltpu.CompilerParams(
            dimension_semantics=("parallel",),
            vmem_limit_bytes=k1_limit),
    )(x_p, ops["mass3"], ops["evals3"], ops["evecs"], time2d)

    # --- Kernel 2: row-tiled gradient features + MLP + residual --------------
    k2_est = _k2_vmem_bytes(vt, v_pad, C, H)
    k2_limit = int(min(budget, max(k2_est + (8 << 20), 16 << 20)))
    shared = lambda shp: pl.BlockSpec(shp, lambda b, r: (0, 0))

    out = pl.pallas_call(
        block_row_kernel,
        out_shape=jax.ShapeDtypeStruct((B, v_pad, C), x_in.dtype),
        grid=(B, n_rows),
        in_specs=[
            pl.BlockSpec((1, vt, C), lambda b, r: (b, r, 0)),       # x row tile
            pl.BlockSpec((1, v_pad, C), lambda b, r: (b, 0, 0)),    # x_diffuse
            pl.BlockSpec((1, vt, v_pad), lambda b, r: (b, r, 0)),   # gradX tile
            pl.BlockSpec((1, vt, v_pad), lambda b, r: (b, r, 0)),   # gradY tile
            shared((C, C)),     # A_re^T
            shared((C, C)),     # A_im^T
            shared((C, H)),     # W1^T slab (x)
            shared((C, H)),     # W1^T slab (x_diffuse)
            shared((C, H)),     # W1^T slab (grad features)
            shared((1, H)),     # b1
            shared((H, C)),     # W2^T
            shared((1, C)),     # b2
        ],
        out_specs=pl.BlockSpec((1, vt, C), lambda b, r: (b, r, 0)),
        compiler_params=pltpu.CompilerParams(
            dimension_semantics=("parallel", "parallel"),
            vmem_limit_bytes=k2_limit),
    )(x_p, x_diffuse, ops["gradX_bf"], ops["gradY_bf"],
      a_re_t, a_im_t, w1x, w1d, w1g, b1_2d, w2_t, b2_2d)

    return out[:, :V, :] if v_pad > V else out


# ----------------------------------------------------------------------------
# Pure-JAX reference mirroring the PyTorch forward (eval mode, f32 throughout).
# ----------------------------------------------------------------------------
def reference(x_in, mass, evals, evecs, gradX, gradY, params):
    time = jnp.maximum(params["time"], 1e-8)
    mx = x_in * mass[..., None]
    x_spec = jnp.einsum("bvk,bvc->bkc", evecs, mx)
    coefs = jnp.exp(-evals[..., None] * time[None, None, :])
    x_diffuse = jnp.einsum("bvk,bkc->bvc", evecs, coefs * x_spec)
    v_re = jnp.einsum("bvw,bwc->bvc", gradX, x_diffuse)
    v_im = jnp.einsum("bvw,bwc->bvc", gradY, x_diffuse)
    b_re = v_re @ params["A_re"].T - v_im @ params["A_im"].T
    b_im = v_im @ params["A_re"].T + v_re @ params["A_im"].T
    gfeat = jnp.tanh(v_re * b_re + v_im * b_im)
    feat = jnp.concatenate([x_in, x_diffuse, gfeat], axis=-1)
    h = jax.nn.relu(feat @ params["W1"].T + params["b1"])
    y = h @ params["W2"].T + params["b2"]
    return y + x_in


if __name__ == "__main__":
    # Module default width C_width=128; single hidden MLP layer (mlp_hidden_dims
    # =[128]); V chosen non-divisible by the row tile to exercise the padding path.
    B, V, K, C = 2, 250, 32, 128
    H = 128

    key = jax.random.PRNGKey(0)
    ks = jax.random.split(key, 12)

    x_in = jax.random.normal(ks[0], (B, V, C), jnp.float32)
    mass = jax.random.uniform(ks[1], (B, V), jnp.float32, 0.5, 1.5)
    evals = jax.random.uniform(ks[2], (B, K), jnp.float32, 0.0, 2.0)
    evecs = jax.random.normal(ks[3], (B, V, K), jnp.float32) / jnp.sqrt(V)
    gradX = jax.random.normal(ks[4], (B, V, V), jnp.float32) * 0.1
    gradY = jax.random.normal(ks[5], (B, V, V), jnp.float32) * 0.1

    params = {
        "time": jax.random.uniform(ks[6], (C,), jnp.float32, 0.0, 0.5),
        "A_re": jax.random.normal(ks[7], (C, C), jnp.float32) * 0.1,
        "A_im": jax.random.normal(ks[8], (C, C), jnp.float32) * 0.1,
        "W1": jax.random.normal(ks[9], (H, 3 * C), jnp.float32) * 0.1,
        "b1": jax.random.normal(ks[10], (H,), jnp.float32) * 0.1,
        "W2": jax.random.normal(ks[11], (C, H), jnp.float32) * 0.1,
        "b2": jnp.zeros((C,), jnp.float32),
    }

    # One-time per-mesh prep (cast + pad of the big V^2 operators, tile choice).
    ops = prepare_mesh_operators(mass, evals, evecs, gradX, gradY,
                                 c_width=C, mlp_hidden=H, row_tile=128)

    out = diffusion_net_block(x_in, ops, params)
    out = jax.block_until_ready(out)

    ref = reference(x_in, mass, evals, evecs, gradX, gradY, params)
    assert out.shape == (B, V, C)
    # Tolerance accounts for bf16 gradX/gradY, bf16 x_diffuse and bf16 MLP
    # weights vs the all-f32 PyTorch-equivalent reference (accumulation is f32
    # everywhere).  Output magnitude is O(1-5), so this is ~1-2% relative.
    max_err = float(jnp.max(jnp.abs(out - ref)))
    assert jnp.allclose(out, ref, atol=7e-2, rtol=5e-2), (
        f"mismatch vs reference, max abs err = {max_err}")

    print("KERNEL_OK")
</pallas_src>

<mosaic_0001>
module attributes {stable_mosaic.version = 11 : i64} {
  func.func @diffusion_kernel(%arg0: i32, %arg1: memref<1x256x128xf32, #tpu.memory_space<vmem>>, %arg2: memref<1x256x1xf32, #tpu.memory_space<vmem>>, %arg3: memref<1x32x1xf32, #tpu.memory_space<vmem>>, %arg4: memref<1x256x32xf32, #tpu.memory_space<vmem>>, %arg5: memref<1x128xf32, #tpu.memory_space<vmem>>, %arg6: memref<1x256x128xbf16, #tpu.memory_space<vmem>>) attributes {dimension_semantics = [#tpu.dimension_semantics<parallel>], iteration_bounds = array<i64: 2>, scalar_prefetch = 0 : i64, scratch_operands = 0 : i64, tpu.core_type = #tpu.core_type<tc>, window_params = [{transform_indices = @transform_0, window_bounds = array<i64: 1, 256, 128>}, {transform_indices = @transform_1, window_bounds = array<i64: 1, 256, 1>}, {transform_indices = @transform_2, window_bounds = array<i64: 1, 32, 1>}, {transform_indices = @transform_3, window_bounds = array<i64: 1, 256, 32>}, {pipeline_mode = #tpu.pipeline_mode<synchronous>, transform_indices = @transform_4, window_bounds = array<i64: 1, 128>}, {transform_indices = @transform_5, window_bounds = array<i64: 1, 256, 128>}]} {
    %c0 = arith.constant 0 : index
    %c0_0 = arith.constant 0 : index
    %c0_1 = arith.constant 0 : index
    %0 = vector.load %arg1[%c0, %c0_0, %c0_1] : memref<1x256x128xf32, #tpu.memory_space<vmem>>, vector<1x256x128xf32>
    %1 = vector.shape_cast %0 : vector<1x256x128xf32> to vector<256x128xf32>
    %c0_2 = arith.constant 0 : index
    %c0_3 = arith.constant 0 : index
    %c0_4 = arith.constant 0 : index
    %2 = vector.load %arg2[%c0_2, %c0_3, %c0_4] : memref<1x256x1xf32, #tpu.memory_space<vmem>>, vector<1x256x1xf32>
    %3 = vector.shape_cast %2 : vector<1x256x1xf32> to vector<256x1xf32>
    %c0_5 = arith.constant 0 : index
    %c0_6 = arith.constant 0 : index
    %c0_7 = arith.constant 0 : index
    %4 = vector.load %arg3[%c0_5, %c0_6, %c0_7] : memref<1x32x1xf32, #tpu.memory_space<vmem>>, vector<1x32x1xf32>
    %5 = vector.shape_cast %4 : vector<1x32x1xf32> to vector<32x1xf32>
    %c0_8 = arith.constant 0 : index
    %c0_9 = arith.constant 0 : index
    %c0_10 = arith.constant 0 : index
    %6 = vector.load %arg4[%c0_8, %c0_9, %c0_10] : memref<1x256x32xf32, #tpu.memory_space<vmem>>, vector<1x256x32xf32>
    %7 = vector.shape_cast %6 : vector<1x256x32xf32> to vector<256x32xf32>
    %c0_11 = arith.constant 0 : index
    %c0_12 = arith.constant 0 : index
    %8 = vector.load %arg5[%c0_11, %c0_12] : memref<1x128xf32, #tpu.memory_space<vmem>>, vector<1x128xf32>
    %cst = arith.constant 9.99999993E-9 : f32
    %9 = vector.broadcast %cst : f32 to vector<1x128xf32>
    %10 = arith.maximumf %8, %9 : vector<1x128xf32>
    %11 = vector.broadcast %3 : vector<256x1xf32> to vector<256x128xf32>
    %12 = arith.mulf %1, %11 : vector<256x128xf32>
    %cst_13 = arith.constant dense<0.000000e+00> : vector<32x128xf32>
    %13 = tpu.matmul %7, %12, %cst_13 {dimension_numbers = #tpu.dot_dimension_numbers<[0], [0], [1], [1], [0, 1, 1, 1], [], []>} : vector<256x32xf32>, vector<256x128xf32>, vector<32x128xf32> -> vector<32x128xf32>
    %cst_14 = arith.constant 0.000000e+00 : f32
    %14 = vector.broadcast %cst_14 : f32 to vector<32x1xf32>
    %15 = arith.subf %14, %5 : vector<32x1xf32>
    %16 = vector.broadcast %15 : vector<32x1xf32> to vector<32x128xf32>
    %17 = vector.broadcast %10 : vector<1x128xf32> to vector<32x128xf32>
    %18 = arith.mulf %16, %17 : vector<32x128xf32>
    %19 = math.exp %18 : vector<32x128xf32>
    %20 = arith.mulf %19, %13 : vector<32x128xf32>
    %cst_15 = arith.constant dense<0.000000e+00> : vector<256x128xf32>
    %21 = tpu.matmul %7, %20, %cst_15 {dimension_numbers = #tpu.dot_dimension_numbers<[1], [0], [0], [1], [0, 0, 1, 1], [], []>} : vector<256x32xf32>, vector<32x128xf32>, vector<256x128xf32> -> vector<256x128xf32>
    %22 = arith.truncf %21 : vector<256x128xf32> to vector<256x128xbf16>
    %c0_16 = arith.constant 0 : index
    %c0_17 = arith.constant 0 : index
    %c0_18 = arith.constant 0 : index
    %23 = vector.load %arg6[%c0_16, %c0_17, %c0_18] : memref<1x256x128xbf16, #tpu.memory_space<vmem>>, vector<1x256x128xbf16>
    %24 = vector.shape_cast %23 : vector<1x256x128xbf16> to vector<256x128xbf16>
    %25 = vector.shape_cast %22 : vector<256x128xbf16> to vector<1x256x128xbf16>
    tpu.vector_store %arg6[%c0_16, %c0_17, %c0_18], %25 {strides = array<i32>} : memref<1x256x128xbf16, #tpu.memory_space<vmem>>, vector<1x256x128xbf16>,
    return
  }
  func.func @transform_0(%arg0: i32) -> (i32, i32, i32) {
    %c0_i32 = arith.constant 0 : i32
    %c0_i32_0 = arith.constant 0 : i32
    %c0_i32_1 = arith.constant 0 : i32
    return %arg0, %c0_i32, %c0_i32_0 : i32, i32, i32
  }
  func.func @transform_1(%arg0: i32) -> (i32, i32, i32) {
    %c0_i32 = arith.constant 0 : i32
    %c0_i32_0 = arith.constant 0 : i32
    %c0_i32_1 = arith.constant 0 : i32
    return %arg0, %c0_i32, %c0_i32_0 : i32, i32, i32
  }
  func.func @transform_2(%arg0: i32) -> (i32, i32, i32) {
    %c0_i32 = arith.constant 0 : i32
    %c0_i32_0 = arith.constant 0 : i32
    %c0_i32_1 = arith.constant 0 : i32
    return %arg0, %c0_i32, %c0_i32_0 : i32, i32, i32
  }
  func.func @transform_3(%arg0: i32) -> (i32, i32, i32) {
    %c0_i32 = arith.constant 0 : i32
    %c0_i32_0 = arith.constant 0 : i32
    %c0_i32_1 = arith.constant 0 : i32
    return %arg0, %c0_i32, %c0_i32_0 : i32, i32, i32
  }
  func.func @transform_4(%arg0: i32) -> (i32, i32) {
    %c0_i32 = arith.constant 0 : i32
    %c0_i32_0 = arith.constant 0 : i32
    %c0_i32_1 = arith.constant 0 : i32
    return %c0_i32, %c0_i32_0 : i32, i32
  }
  func.func @transform_5(%arg0: i32) -> (i32, i32, i32) {
    %c0_i32 = arith.constant 0 : i32
    %c0_i32_0 = arith.constant 0 : i32
    %c0_i32_1 = arith.constant 0 : i32
    return %arg0, %c0_i32, %c0_i32_0 : i32, i32, i32
  }
}

</mosaic_0001>

<llo_original>
// kernel: tpu_custom_call.1
$region0: #{tpu_custom_call.1}
  #allocation0 [shape = 'u32[]', space=smem, size = 0x4, offset = 0x4, fixed_abs, tag = 'smem constant byte address 0x4 - core index']
  #allocation1 [shape = 'u32[144,128]{1,0:T(1,128)}', space=vmem, size = 0x12000, scoped, tag = 'internal scratch']
  %s0 = inlined_call_operand.vmem [shape: f32[2,256,128], index: 0, kind: input, shape index: {}]
  %s1 = inlined_call_operand.vmem [shape: f32[2,256,1], index: 1, kind: input, shape index: {}]
  %s2 = inlined_call_operand.vmem [shape: f32[2,32,1], index: 2, kind: input, shape index: {}]
  %s3 = inlined_call_operand.vmem [shape: f32[2,256,32], index: 3, kind: input, shape index: {}]
  %s4 = inlined_call_operand.vmem [shape: f32[1,128], index: 4, kind: input, shape index: {}]
  %s5 = inlined_call_operand.hbm [shape: bf16[2,256,128], index: 5, kind: output, shape index: {}]
  %s6 = sld [smem:[#allocation0]]
  $region53: #{tpu_custom_call.1} parent=0
    _
  %s8 = ssub.s32 1, %s6
  %s9 = scalar_select 0, %s8, %s6
  $region1: #{tpu_custom_call.1} parent=0
    #allocation2 [shape = 'u8[131072]{0}', space=vmem, size = 0x20000, scoped, tag = 'output window, operand 0']
    #allocation3 [shape = 's32[2]{0}', space=sflag, size = 0x8, scoped, tag = 'scoped memory for tpu_custom_call.1']
    %10 = vsyncpa [#allocation3], 0
    %s11 = scalar_lea.sflag [#allocation3], 1
    %12 = vsyncpa %s11, 0
    loop: start=0, step=1, limit=4
    $region2: #{tpu_custom_call.1} parent=1 // loop_pre_header
      _
    $region3: #{tpu_custom_call.1} parent=1 // loop_header
      %s14 = sphi 0, %s18
      %p15 = scmp.ge.s32.totalorder %s14, 4
      %s24 = sphi 0, %s26
      %s27 = sphi 0, %s24
      %s28 = sphi 0, %s27
      %s44 = sphi 0, %s28
      %s50 = sphi 0, %s52
      %s53 = sphi 0, %s50
      %s54 = sphi 0, %s53
      %s70 = sphi 0, %s54
      %s76 = sphi 0, %s78
      %s79 = sphi 0, %s76
      %s80 = sphi 0, %s79
      %s96 = sphi 0, %s80
      %s102 = sphi 0, %s104
      %s105 = sphi 0, %s102
      %s106 = sphi 0, %s105
      %s122 = sphi 0, %s106
      %s126 = sphi 0, %s126
      %s128 = sphi 0, %s126
      %s129 = sphi 0, %s128
      %s143 = sphi 0, %s129
      %s149 = sphi 0, %s151
      %s152 = sphi 0, %s149
      %s153 = sphi 0, %s152
      %s169 = sphi 0, %s153
    $region4: #{tpu_custom_call.1} parent=1 // loop_header_branch
      %17 = sbr.rel (%p15) target = $region8
    $region5: #{tpu_custom_call.1} parent=1 // loop_body
      %s19 = ssub.s32 %s14, 1
      %s20 = ssub.s32 %s14, 2
      %s21 = sadd.s32 %s14, 1
      %s22 = ssub.s32 %s14, %s21
      %p23 = scmp.eq.s32.totalorder %s22, 0
      %s25 = sadd.s32 %s24, 1
      %s26 = scalar_select %p23, %s24, %s25
      %p29 = pneg %p23
      %p30 = scmp.eq.s32.totalorder %s14, 1
      %p31 = por %p29, %p30
      %p32 = scmp.ne.s32.totalorder %s24, %s27
      %p33 = scmp.eq.s32.totalorder %s14, 0
      %p34 = por %p32, %p33
      %p35 = scmp.ne.s32.totalorder %s24, %s27
      %p36 = scmp.eq.s32.totalorder %s19, 1
      %p37 = por %p35, %p36
      %p38 = scmp.ne.s32.totalorder %s27, %s28
      %p39 = scmp.eq.s32.totalorder %s19, 0
      %p40 = por %p38, %p39
      %p41 = scmp.ne.s32.totalorder %s27, %s28
      %p42 = scmp.eq.s32.totalorder %s20, 1
      %p43 = por %p41, %p42
      %p45 = scmp.ne.s32.totalorder %s28, %s44
      %p46 = scmp.eq.s32.totalorder %s20, 0
      %p47 = por %p45, %p46
      %s48 = ssub.s32 %s14, %s21
      %p49 = scmp.eq.s32.totalorder %s48, 0
      %s51 = sadd.s32 %s50, 1
      %s52 = scalar_select %p49, %s50, %s51
      %p55 = pneg %p49
      %p56 = scmp.eq.s32.totalorder %s14, 1
      %p57 = por %p55, %p56
      %p58 = scmp.ne.s32.totalorder %s50, %s53
      %p59 = scmp.eq.s32.totalorder %s14, 0
      %p60 = por %p58, %p59
      %p61 = scmp.ne.s32.totalorder %s50, %s53
      %p62 = scmp.eq.s32.totalorder %s19, 1
      %p63 = por %p61, %p62
      %p64 = scmp.ne.s32.totalorder %s53, %s54
      %p65 = scmp.eq.s32.totalorder %s19, 0
      %p66 = por %p64, %p65
      %p67 = scmp.ne.s32.totalorder %s53, %s54
      %p68 = scmp.eq.s32.totalorder %s20, 1
      %p69 = por %p67, %p68
      %p71 = scmp.ne.s32.totalorder %s54, %s70
      %p72 = scmp.eq.s32.totalorder %s20, 0
      %p73 = por %p71, %p72
      %s74 = ssub.s32 %s14, %s21
      %p75 = scmp.eq.s32.totalorder %s74, 0
      %s77 = sadd.s32 %s76, 1
      %s78 = scalar_select %p75, %s76, %s77
      %p81 = pneg %p75
      %p82 = scmp.eq.s32.totalorder %s14, 1
      %p83 = por %p81, %p82
      %p84 = scmp.ne.s32.totalorder %s76, %s79
      %p85 = scmp.eq.s32.totalorder %s14, 0
      %p86 = por %p84, %p85
      %p87 = scmp.ne.s32.totalorder %s76, %s79
      %p88 = scmp.eq.s32.totalorder %s19, 1
      %p89 = por %p87, %p88
      %p90 = scmp.ne.s32.totalorder %s79, %s80
      %p91 = scmp.eq.s32.totalorder %s19, 0
      %p92 = por %p90, %p91
      %p93 = scmp.ne.s32.totalorder %s79, %s80
      %p94 = scmp.eq.s32.totalorder %s20, 1
      %p95 = por %p93, %p94
      %p97 = scmp.ne.s32.totalorder %s80, %s96
      %p98 = scmp.eq.s32.totalorder %s20, 0
      %p99 = por %p97, %p98
      %s100 = ssub.s32 %s14, %s21
      %p101 = scmp.eq.s32.totalorder %s100, 0
      %s103 = sadd.s32 %s102, 1
      %s104 = scalar_select %p101, %s102, %s103
      %p107 = pneg %p101
      %p108 = scmp.eq.s32.totalorder %s14, 1
      %p109 = por %p107, %p108
      %p110 = scmp.ne.s32.totalorder %s102, %s105
      %p111 = scmp.eq.s32.totalorder %s14, 0
      %p112 = por %p110, %p111
      %p113 = scmp.ne.s32.totalorder %s102, %s105
      %p114 = scmp.eq.s32.totalorder %s19, 1
      %p115 = por %p113, %p114
      %p116 = scmp.ne.s32.totalorder %s105, %s106
      %p117 = scmp.eq.s32.totalorder %s19, 0
      %p118 = por %p116, %p117
      %p119 = scmp.ne.s32.totalorder %s105, %s106
      %p120 = scmp.eq.s32.totalorder %s20, 1
      %p121 = por %p119, %p120
      %p123 = scmp.ne.s32.totalorder %s106, %s122
      %p124 = scmp.eq.s32.totalorder %s20, 0
      %p125 = por %p123, %p124
      %s127 = sadd.s32 %s126, 1
      %p130 = scmp.eq.s32.totalorder %s14, 1
      %p131 = scmp.ne.s32.totalorder %s126, %s128
      %p132 = scmp.eq.s32.totalorder %s14, 0
      %p133 = por %p131, %p132
      %p134 = scmp.ne.s32.totalorder %s126, %s128
      %p135 = scmp.eq.s32.totalorder %s19, 1
      %p136 = por %p134, %p135
      %p137 = scmp.ne.s32.totalorder %s128, %s129
      %p138 = scmp.eq.s32.totalorder %s19, 0
      %p139 = por %p137, %p138
      %p140 = scmp.ne.s32.totalorder %s128, %s129
      %p141 = scmp.eq.s32.totalorder %s20, 1
      %p142 = por %p140, %p141
      %p144 = scmp.ne.s32.totalorder %s129, %s143
      %p145 = scmp.eq.s32.totalorder %s20, 0
      %p146 = por %p144, %p145
      %s147 = ssub.s32 %s14, %s21
      %p148 = scmp.eq.s32.totalorder %s147, 0
      %s150 = sadd.s32 %s149, 1
      %s151 = scalar_select %p148, %s149, %s150
      %p154 = pneg %p148
      %p155 = scmp.eq.s32.totalorder %s14, 1
      %p156 = por %p154, %p155
      %p157 = scmp.ne.s32.totalorder %s149, %s152
      %p158 = scmp.eq.s32.totalorder %s14, 0
      %p159 = por %p157, %p158
      %p160 = scmp.ne.s32.totalorder %s149, %s152
      %p161 = scmp.eq.s32.totalorder %s19, 1
      %p162 = por %p160, %p161
      %p163 = scmp.ne.s32.totalorder %s152, %s153
      %p164 = scmp.eq.s32.totalorder %s19, 0
      %p165 = por %p163, %p164
      %p166 = scmp.ne.s32.totalorder %s152, %s153
      %p167 = scmp.eq.s32.totalorder %s20, 1
      %p168 = por %p166, %p167
      %p170 = scmp.ne.s32.totalorder %s153, %s169
      %p171 = scmp.eq.s32.totalorder %s20, 0
      %p172 = por %p170, %p171
      %p173 = scmp.le.s32.totalorder 1, %s14
      %p174 = scmp.lt.s32.totalorder %s14, 3
      %p175 = pnand %p173, %p174
      %p176 = pneg %p175
      // Predicated region
      $region9: #{tpu_custom_call.1} parent=5 // pred_check
        _
      $region10: #{tpu_custom_call.1} parent=5 // pred_check_branch
        %178 = sbr.rel (%p175) target = $region12
      $region11: #{tpu_custom_call.1} parent=5 // pred_region
        %s179 = ssub.s32 %s14, 1
        // Predicated region
        $region13: #{tpu_custom_call.1} parent=11 // pred_check
          %p180 = pneg %p139
        $region14: #{tpu_custom_call.1} parent=11 // pred_check_branch
          %182 = sbr.rel (%p180) target = $region16
        $region15: #{tpu_custom_call.1} parent=11 // pred_region
          _
        $region16: #{tpu_custom_call.1} parent=11 // pred_fallthru
          _
      $region12: #{tpu_custom_call.1} parent=5 // pred_fallthru
        _
      %p183 = scmp.lt.s32.totalorder %s14, 2
      // Predicated region
      $region17: #{tpu_custom_call.1} parent=5 // pred_check
        %p184 = pneg %p183
      $region18: #{tpu_custom_call.1} parent=5 // pred_check_branch
        %186 = sbr.rel (%p184) target = $region20
      $region19: #{tpu_custom_call.1} parent=5 // pred_region
        // Predicated region
        $region21: #{tpu_custom_call.1} parent=19 // pred_check
          %p187 = pneg %p34
        $region22: #{tpu_custom_call.1} parent=19 // pred_check_branch
          %189 = sbr.rel (%p187) target = $region24
        $region23: #{tpu_custom_call.1} parent=19 // pred_region
          %p190 = scmp.lt.s32.totalorder %s14, 1
          %s191 = scalar_select %p190, %s14, 1
          %s192 = smul.addr %s191, 32
          %s193 = smul.addr %s192, 8
          %s194 = scalar_lea.vmem %s0, %s193
        $region24: #{tpu_custom_call.1} parent=19 // pred_fallthru
          _
        // Predicated region
        $region25: #{tpu_custom_call.1} parent=19 // pred_check
          %p195 = pneg %p60
        $region26: #{tpu_custom_call.1} parent=19 // pred_check_branch
          %197 = sbr.rel (%p195) target = $region28
        $region27: #{tpu_custom_call.1} parent=19 // pred_region
          %p198 = scmp.lt.s32.totalorder %s14, 1
          %s199 = scalar_select %p198, %s14, 1
          %s200 = smul.addr %s199, 32
          %s201 = smul.addr %s200, 8
          %s202 = scalar_lea.vmem %s1, %s201
        $region28: #{tpu_custom_call.1} parent=19 // pred_fallthru
          _
        // Predicated region
        $region29: #{tpu_custom_call.1} parent=19 // pred_check
          %p203 = pneg %p86
        $region30: #{tpu_custom_call.1} parent=19 // pred_check_branch
          %205 = sbr.rel (%p203) target = $region32
        $region31: #{tpu_custom_call.1} parent=19 // pred_region
          %p206 = scmp.lt.s32.totalorder %s14, 1
          %s207 = scalar_select %p206, %s14, 1
          %s208 = smul.addr %s207, 4
          %s209 = smul.addr %s208, 8
          %s210 = scalar_lea.vmem %s2, %s209
        $region32: #{tpu_custom_call.1} parent=19 // pred_fallthru
          _
        // Predicated region
        $region33: #{tpu_custom_call.1} parent=19 // pred_check
          %p211 = pneg %p112
        $region34: #{tpu_custom_call.1} parent=19 // pred_check_branch
          %213 = sbr.rel (%p211) target = $region36
        $region35: #{tpu_custom_call.1} parent=19 // pred_region
          %p214 = scmp.lt.s32.totalorder %s14, 1
          %s215 = scalar_select %p214, %s14, 1
          %s216 = smul.addr %s215, 32
          %s217 = smul.addr %s216, 8
          %s218 = scalar_lea.vmem %s3, %s217
        $region36: #{tpu_custom_call.1} parent=19 // pred_fallthru
          _
      $region20: #{tpu_custom_call.1} parent=5 // pred_fallthru
        _
      %p219 = scmp.le.s32.totalorder 1, %s14
      %p220 = scmp.lt.s32.totalorder %s14, 3
      %p221 = pnand %p219, %p220
      %p222 = pneg %p221
      // Predicated region
      $region37: #{tpu_custom_call.1} parent=5 // pred_check
        _
      $region38: #{tpu_custom_call.1} parent=5 // pred_check_branch
        %224 = sbr.rel (%p221) target = $region40
      $region39: #{tpu_custom_call.1} parent=5 // pred_region
        %s225 = ssub.s32 %s14, 1
        %p226 = scmp.lt.s32.totalorder %s19, 1
        %s227 = scalar_select %p226, %s19, 1
        %s228 = smul.addr %s227, 32
        %s229 = smul.addr %s228, 8
        %s230 = scalar_lea.vmem %s0, %s229
        %p231 = pneg %p40
        %p232 = pneg %p37
        %p233 = scmp.lt.s32.totalorder %s19, 1
        %s234 = scalar_select %p233, %s19, 1
        %s235 = smul.addr %s234, 32
        %s236 = smul.addr %s235, 8
        %s237 = scalar_lea.vmem %s1, %s236
        %p238 = pneg %p66
        %p239 = pneg %p63
        %p240 = scmp.lt.s32.totalorder %s19, 1
        %s241 = scalar_select %p240, %s19, 1
        %s242 = smul.addr %s241, 4
        %s243 = smul.addr %s242, 8
        %s244 = scalar_lea.vmem %s2, %s243
        %p245 = pneg %p92
        %p246 = pneg %p89
        %p247 = scmp.lt.s32.totalorder %s19, 1
        %s248 = scalar_select %p247, %s19, 1
        %s249 = smul.addr %s248, 32
        %s250 = smul.addr %s249, 8
        %s251 = scalar_lea.vmem %s3, %s250
        %p252 = pneg %p118
        %p253 = pneg %p115
        %p254 = pneg %p139
        %p255 = pneg %p136
        %p256 = pneg %p165
        %p257 = pneg %p162
        %s258 = sand.u32 %s152, 1
        %s259 = scalar_lea.sflag [#allocation3], %s258
        %s260 = sand.u32 %s152, 1
        %s261 = smul.addr %s260, 128
        %s262 = scalar_lea.vmem [#allocation2], %s261
        %p263 = scmp.lt.s32.totalorder %s19, 1
        %s264 = scalar_select %p263, %s19, 1
        %s265 = smul.addr %s264, 32
        %s266 = smul.addr %s265, 8
        %s267 = scalar_lea.vmem %s0, %s266
        %p268 = scmp.lt.s32.totalorder %s19, 1
        %s269 = scalar_select %p268, %s19, 1
        %s270 = smul.addr %s269, 32
        %s271 = smul.addr %s270, 8
        %s272 = scalar_lea.vmem %s1, %s271
        %p273 = scmp.lt.s32.totalorder %s19, 1
        %s274 = scalar_select %p273, %s19, 1
        %s275 = smul.addr %s274, 4
        %s276 = smul.addr %s275, 8
        %s277 = scalar_lea.vmem %s2, %s276
        %p278 = scmp.lt.s32.totalorder %s19, 1
        %s279 = scalar_select %p278, %s19, 1
        %s280 = smul.addr %s279, 32
        %s281 = smul.addr %s280, 8
        %s282 = scalar_lea.vmem %s3, %s281
        %v283 = vld [vmem:[%s267] sm:$0xff]
        %v284 = vld [vmem:[%s267 + $0x8] sm:$0xff]
        %v285 = vld [vmem:[%s267 + $0x10] sm:$0xff]
        %v286 = vld [vmem:[%s267 + $0x18] sm:$0xff]
        %v287 = vld [vmem:[%s267 + $0x20] sm:$0xff]
        %v288 = vld [vmem:[%s267 + $0x28] sm:$0xff]
        %v289 = vld [vmem:[%s267 + $0x30] sm:$0xff]
        %v290 = vld [vmem:[%s267 + $0x38] sm:$0xff]
        %v291 = vld [vmem:[%s267 + $0x40] sm:$0xff]
        %v292 = vld [vmem:[%s267 + $0x48] sm:$0xff]
        %v293 = vld [vmem:[%s267 + $0x50] sm:$0xff]
        %v294 = vld [vmem:[%s267 + $0x58] sm:$0xff]
        %v295 = vld [vmem:[%s267 + $0x60] sm:$0xff]
        %v296 = vld [vmem:[%s267 + $0x68] sm:$0xff]
        %v297 = vld [vmem:[%s267 + $0x70] sm:$0xff]
        %v298 = vld [vmem:[%s267 + $0x78] sm:$0xff]
        %v299 = vld [vmem:[%s267 + $0x80] sm:$0xff]
        %v300 = vld [vmem:[%s267 + $0x88] sm:$0xff]
        %v301 = vld [vmem:[%s267 + $0x90] sm:$0xff]
        %v302 = vld [vmem:[%s267 + $0x98] sm:$0xff]
        %v303 = vld [vmem:[%s267 + $0xa0] sm:$0xff]
        %v304 = vld [vmem:[%s267 + $0xa8] sm:$0xff]
        %v305 = vld [vmem:[%s267 + $0xb0] sm:$0xff]
        %v306 = vld [vmem:[%s267 + $0xb8] sm:$0xff]
        %v307 = vld [vmem:[%s267 + $0xc0] sm:$0xff]
        %v308 = vld [vmem:[%s267 + $0xc8] sm:$0xff]
        %v309 = vld [vmem:[%s267 + $0xd0] sm:$0xff]
        %v310 = vld [vmem:[%s267 + $0xd8] sm:$0xff]
        %v311 = vld [vmem:[%s267 + $0xe0] sm:$0xff]
        %v312 = vld [vmem:[%s267 + $0xe8] sm:$0xff]
        %v313 = vld [vmem:[%s267 + $0xf0] sm:$0xff]
        %v314 = vld [vmem:[%s267 + $0xf8] sm:$0xff]
        %v315 = vld [vmem:[%s272] sm:$0xff]
        %v316 = vld [vmem:[%s272 + $0x8] sm:$0xff]
        %v317 = vld [vmem:[%s272 + $0x10] sm:$0xff]
        %v318 = vld [vmem:[%s272 + $0x18] sm:$0xff]
        %v319 = vld [vmem:[%s272 + $0x20] sm:$0xff]
        %v320 = vld [vmem:[%s272 + $0x28] sm:$0xff]
        %v321 = vld [vmem:[%s272 + $0x30] sm:$0xff]
        %v322 = vld [vmem:[%s272 + $0x38] sm:$0xff]
        %v323 = vld [vmem:[%s272 + $0x40] sm:$0xff]
        %v324 = vld [vmem:[%s272 + $0x48] sm:$0xff]
        %v325 = vld [vmem:[%s272 + $0x50] sm:$0xff]
        %v326 = vld [vmem:[%s272 + $0x58] sm:$0xff]
        %v327 = vld [vmem:[%s272 + $0x60] sm:$0xff]
        %v328 = vld [vmem:[%s272 + $0x68] sm:$0xff]
        %v329 = vld [vmem:[%s272 + $0x70] sm:$0xff]
        %v330 = vld [vmem:[%s272 + $0x78] sm:$0xff]
        %v331 = vld [vmem:[%s272 + $0x80] sm:$0xff]
        %v332 = vld [vmem:[%s272 + $0x88] sm:$0xff]
        %v333 = vld [vmem:[%s272 + $0x90] sm:$0xff]
        %v334 = vld [vmem:[%s272 + $0x98] sm:$0xff]
        %v335 = vld [vmem:[%s272 + $0xa0] sm:$0xff]
        %v336 = vld [vmem:[%s272 + $0xa8] sm:$0xff]
        %v337 = vld [vmem:[%s272 + $0xb0] sm:$0xff]
        %v338 = vld [vmem:[%s272 + $0xb8] sm:$0xff]
        %v339 = vld [vmem:[%s272 + $0xc0] sm:$0xff]
        %v340 = vld [vmem:[%s272 + $0xc8] sm:$0xff]
        %v341 = vld [vmem:[%s272 + $0xd0] sm:$0xff]
        %v342 = vld [vmem:[%s272 + $0xd8] sm:$0xff]
        %v343 = vld [vmem:[%s272 + $0xe0] sm:$0xff]
        %v344 = vld [vmem:[%s272 + $0xe8] sm:$0xff]
        %v345 = vld [vmem:[%s272 + $0xf0] sm:$0xff]
        %v346 = vld [vmem:[%s272 + $0xf8] sm:$0xff]
        %v347 = vld [vmem:[%s277] sm:$0xff]
        %v348 = vld [vmem:[%s277 + $0x8] sm:$0xff]
        %v349 = vld [vmem:[%s277 + $0x10] sm:$0xff]
        %v350 = vld [vmem:[%s277 + $0x18] sm:$0xff]
        %v351 = vld [vmem:[%s282] sm:$0xff]
        %v352 = vld [vmem:[%s282 + $0x8] sm:$0xff]
        %v353 = vld [vmem:[%s282 + $0x10] sm:$0xff]
        %v354 = vld [vmem:[%s282 + $0x18] sm:$0xff]
        %v355 = vld [vmem:[%s282 + $0x20] sm:$0xff]
        %v356 = vld [vmem:[%s282 + $0x28] sm:$0xff]
        %v357 = vld [vmem:[%s282 + $0x30] sm:$0xff]
        %v358 = vld [vmem:[%s282 + $0x38] sm:$0xff]
        %v359 = vld [vmem:[%s282 + $0x40] sm:$0xff]
        %v360 = vld [vmem:[%s282 + $0x48] sm:$0xff]
        %v361 = vld [vmem:[%s282 + $0x50] sm:$0xff]
        %v362 = vld [vmem:[%s282 + $0x58] sm:$0xff]
        %v363 = vld [vmem:[%s282 + $0x60] sm:$0xff]
        %v364 = vld [vmem:[%s282 + $0x68] sm:$0xff]
        %v365 = vld [vmem:[%s282 + $0x70] sm:$0xff]
        %v366 = vld [vmem:[%s282 + $0x78] sm:$0xff]
        %v367 = vld [vmem:[%s282 + $0x80] sm:$0xff]
        %v368 = vld [vmem:[%s282 + $0x88] sm:$0xff]
        %v369 = vld [vmem:[%s282 + $0x90] sm:$0xff]
        %v370 = vld [vmem:[%s282 + $0x98] sm:$0xff]
        %v371 = vld [vmem:[%s282 + $0xa0] sm:$0xff]
        %v372 = vld [vmem:[%s282 + $0xa8] sm:$0xff]
        %v373 = vld [vmem:[%s282 + $0xb0] sm:$0xff]
        %v374 = vld [vmem:[%s282 + $0xb8] sm:$0xff]
        %v375 = vld [vmem:[%s282 + $0xc0] sm:$0xff]
        %v376 = vld [vmem:[%s282 + $0xc8] sm:$0xff]
        %v377 = vld [vmem:[%s282 + $0xd0] sm:$0xff]
        %v378 = vld [vmem:[%s282 + $0xd8] sm:$0xff]
        %v379 = vld [vmem:[%s282 + $0xe0] sm:$0xff]
        %v380 = vld [vmem:[%s282 + $0xe8] sm:$0xff]
        %v381 = vld [vmem:[%s282 + $0xf0] sm:$0xff]
        %v382 = vld [vmem:[%s282 + $0xf8] sm:$0xff]
        %v383 = vld [vmem:[%s4] sm:$0x1]
        %v384 = vmax.f32 %v383, 1e-08
        %386 = vset.pattern.permute.xlu0 0
        %387 = vperm.xlu0 %386, %v315
        %v388 = vpop.permute.xlu0 %387
        %391 = vset.pattern.permute.xlu0 0
        %392 = vperm.xlu0 %391, %v316
        %v393 = vpop.permute.xlu0 %392
        %396 = vset.pattern.permute.xlu0 0
        %397 = vperm.xlu0 %396, %v317
        %v398 = vpop.permute.xlu0 %397
        %401 = vset.pattern.permute.xlu0 0
        %402 = vperm.xlu0 %401, %v318
        %v403 = vpop.permute.xlu0 %402
        %406 = vset.pattern.permute.xlu0 0
        %407 = vperm.xlu0 %406, %v319
        %v408 = vpop.permute.xlu0 %407
        %411 = vset.pattern.permute.xlu0 0
        %412 = vperm.xlu0 %411, %v320
        %v413 = vpop.permute.xlu0 %412
        %416 = vset.pattern.permute.xlu0 0
        %417 = vperm.xlu0 %416, %v321
        %v418 = vpop.permute.xlu0 %417
        %421 = vset.pattern.permute.xlu0 0
        %422 = vperm.xlu0 %421, %v322
        %v423 = vpop.permute.xlu0 %422
        %426 = vset.pattern.permute.xlu0 0
        %427 = vperm.xlu0 %426, %v323
        %v428 = vpop.permute.xlu0 %427
        %431 = vset.pattern.permute.xlu0 0
        %432 = vperm.xlu0 %431, %v324
        %v433 = vpop.permute.xlu0 %432
        %436 = vset.pattern.permute.xlu0 0
        %437 = vperm.xlu0 %436, %v325
        %v438 = vpop.permute.xlu0 %437
        %441 = vset.pattern.permute.xlu0 0
        %442 = vperm.xlu0 %441, %v326
        %v443 = vpop.permute.xlu0 %442
        %446 = vset.pattern.permute.xlu0 0
        %447 = vperm.xlu0 %446, %v327
        %v448 = vpop.permute.xlu0 %447
        %451 = vset.pattern.permute.xlu0 0
        %452 = vperm.xlu0 %451, %v328
        %v453 = vpop.permute.xlu0 %452
        %456 = vset.pattern.permute.xlu0 0
        %457 = vperm.xlu0 %456, %v329
        %v458 = vpop.permute.xlu0 %457
        %461 = vset.pattern.permute.xlu0 0
        %462 = vperm.xlu0 %461, %v330
        %v463 = vpop.permute.xlu0 %462
        %466 = vset.pattern.permute.xlu0 0
        %467 = vperm.xlu0 %466, %v331
        %v468 = vpop.permute.xlu0 %467
        %471 = vset.pattern.permute.xlu0 0
        %472 = vperm.xlu0 %471, %v332
        %v473 = vpop.permute.xlu0 %472
        %476 = vset.pattern.permute.xlu0 0
        %477 = vperm.xlu0 %476, %v333
        %v478 = vpop.permute.xlu0 %477
        %481 = vset.pattern.permute.xlu0 0
        %482 = vperm.xlu0 %481, %v334
        %v483 = vpop.permute.xlu0 %482
        %486 = vset.pattern.permute.xlu0 0
        %487 = vperm.xlu0 %486, %v335
        %v488 = vpop.permute.xlu0 %487
        %491 = vset.pattern.permute.xlu0 0
        %492 = vperm.xlu0 %491, %v336
        %v493 = vpop.permute.xlu0 %492
        %496 = vset.pattern.permute.xlu0 0
        %497 = vperm.xlu0 %496, %v337
        %v498 = vpop.permute.xlu0 %497
        %501 = vset.pattern.permute.xlu0 0
        %502 = vperm.xlu0 %501, %v338
        %v503 = vpop.permute.xlu0 %502
        %506 = vset.pattern.permute.xlu0 0
        %507 = vperm.xlu0 %506, %v339
        %v508 = vpop.permute.xlu0 %507
        %511 = vset.pattern.permute.xlu0 0
        %512 = vperm.xlu0 %511, %v340
        %v513 = vpop.permute.xlu0 %512
        %516 = vset.pattern.permute.xlu0 0
        %517 = vperm.xlu0 %516, %v341
        %v518 = vpop.permute.xlu0 %517
        %521 = vset.pattern.permute.xlu0 0
        %522 = vperm.xlu0 %521, %v342
        %v523 = vpop.permute.xlu0 %522
        %526 = vset.pattern.permute.xlu0 0
        %527 = vperm.xlu0 %526, %v343
        %v528 = vpop.permute.xlu0 %527
        %531 = vset.pattern.permute.xlu0 0
        %532 = vperm.xlu0 %531, %v344
        %v533 = vpop.permute.xlu0 %532
        %536 = vset.pattern.permute.xlu0 0
        %537 = vperm.xlu0 %536, %v345
        %v538 = vpop.permute.xlu0 %537
        %541 = vset.pattern.permute.xlu0 0
        %542 = vperm.xlu0 %541, %v346
        %v543 = vpop.permute.xlu0 %542
        %v545 = vmul.f32 %v283, %v388
        %v546 = vmul.f32 %v284, %v393
        %v547 = vmul.f32 %v285, %v398
        %v548 = vmul.f32 %v286, %v403
        %v549 = vmul.f32 %v287, %v408
        %v550 = vmul.f32 %v288, %v413
        %v551 = vmul.f32 %v289, %v418
        %v552 = vmul.f32 %v290, %v423
        %v553 = vmul.f32 %v291, %v428
        %v554 = vmul.f32 %v292, %v433
        %v555 = vmul.f32 %v293, %v438
        %v556 = vmul.f32 %v294, %v443
        %v557 = vmul.f32 %v295, %v448
        %v558 = vmul.f32 %v296, %v453
        %v559 = vmul.f32 %v297, %v458
        %v560 = vmul.f32 %v298, %v463
        %v561 = vmul.f32 %v299, %v468
        %v562 = vmul.f32 %v300, %v473
        %v563 = vmul.f32 %v301, %v478
        %v564 = vmul.f32 %v302, %v483
        %v565 = vmul.f32 %v303, %v488
        %v566 = vmul.f32 %v304, %v493
        %v567 = vmul.f32 %v305, %v498
        %v568 = vmul.f32 %v306, %v503
        %v569 = vmul.f32 %v307, %v508
        %v570 = vmul.f32 %v308, %v513
        %v571 = vmul.f32 %v309, %v518
        %v572 = vmul.f32 %v310, %v523
        %v573 = vmul.f32 %v311, %v528
        %v574 = vmul.f32 %v312, %v533
        %v575 = vmul.f32 %v313, %v538
        %v576 = vmul.f32 %v314, %v543
        %577 = vxpose.xlu0.b32.start [1/16] %v351, 128
        %578 = vxpose.xlu0.b32.cont [2/16] %v352, 128
        %579 = vxpose.xlu0.b32.cont [3/16] %v353, 128
        %580 = vxpose.xlu0.b32.cont [4/16] %v354, 128
        %581 = vxpose.xlu0.b32.cont [5/16] %v355, 128
        %582 = vxpose.xlu0.b32.cont [6/16] %v356, 128
        %583 = vxpose.xlu0.b32.cont [7/16] %v357, 128
        %584 = vxpose.xlu0.b32.cont [8/16] %v358, 128
        %585 = vxpose.xlu0.b32.cont [9/16] %v359, 128
        %586 = vxpose.xlu0.b32.cont [10/16] %v360, 128
        %587 = vxpose.xlu0.b32.cont [11/16] %v361, 128
        %588 = vxpose.xlu0.b32.cont [12/16] %v362, 128
        %589 = vxpose.xlu0.b32.cont [13/16] %v363, 128
        %590 = vxpose.xlu0.b32.cont [14/16] %v364, 128
        %591 = vxpose.xlu0.b32.cont [15/16] %v365, 128
        %592 = vxpose.xlu0.b32.end [16/16] %v366, 128
        %v593 = vpop.trf.xlu0
        %v594 = vpop.trf.xlu0
        %v595 = vpop.trf.xlu0
        %v596 = vpop.trf.xlu0
        %v597 = vpop.trf.xlu0
        %v598 = vpop.trf.xlu0
        %v599 = vpop.trf.xlu0
        %v600 = vpop.trf.xlu0
        %v601 = vpop.trf.xlu0
        %v602 = vpop.trf.xlu0
        %v603 = vpop.trf.xlu0
        %v604 = vpop.trf.xlu0
        %v605 = vpop.trf.xlu0
        %v606 = vpop.trf.xlu0
        %v607 = vpop.trf.xlu0
        %v608 = vpop.trf.xlu0
        %609 = vxpose.xlu0.b32.start [1/16] %v367, 128
        %610 = vxpose.xlu0.b32.cont [2/16] %v368, 128
        %611 = vxpose.xlu0.b32.cont [3/16] %v369, 128
        %612 = vxpose.xlu0.b32.cont [4/16] %v370, 128
        %613 = vxpose.xlu0.b32.cont [5/16] %v371, 128
        %614 = vxpose.xlu0.b32.cont [6/16] %v372, 128
        %615 = vxpose.xlu0.b32.cont [7/16] %v373, 128
        %616 = vxpose.xlu0.b32.cont [8/16] %v374, 128
        %617 = vxpose.xlu0.b32.cont [9/16] %v375, 128
        %618 = vxpose.xlu0.b32.cont [10/16] %v376, 128
        %619 = vxpose.xlu0.b32.cont [11/16] %v377, 128
        %620 = vxpose.xlu0.b32.cont [12/16] %v378, 128
        %621 = vxpose.xlu0.b32.cont [13/16] %v379, 128
        %622 = vxpose.xlu0.b32.cont [14/16] %v380, 128
        %623 = vxpose.xlu0.b32.cont [15/16] %v381, 128
        %624 = vxpose.xlu0.b32.end [16/16] %v382, 128
        %v625 = vpop.trf.xlu0
        %v626 = vpop.trf.xlu0
        %v627 = vpop.trf.xlu0
        %v628 = vpop.trf.xlu0
        %v629 = vpop.trf.xlu0
        %v630 = vpop.trf.xlu0
        %v631 = vpop.trf.xlu0
        %v632 = vpop.trf.xlu0
        %v633 = vpop.trf.xlu0
        %v634 = vpop.trf.xlu0
        %v635 = vpop.trf.xlu0
        %v636 = vpop.trf.xlu0
        %v637 = vpop.trf.xlu0
        %v638 = vpop.trf.xlu0
        %v639 = vpop.trf.xlu0
        %v640 = vpop.trf.xlu0
        %641 = vmatprep.subr.mxu0 0.0
        %642 = vmatpush1.msra.mxu0 %v545
        %643 = vmatprep.subr.mxu0 0.0
        %644 = vmatpush1.msra.mxu0 %v546
        %645 = vmatprep.subr.mxu0 0.0
        %646 = vmatpush1.msra.mxu0 %v547
        %647 = vmatprep.subr.mxu0 0.0
        %648 = vmatpush1.msra.mxu0 %v548
        %649 = vmatprep.subr.mxu0 0.0
        %650 = vmatpush1.msra.mxu0 %v549
        %651 = vmatprep.subr.mxu0 0.0
        %652 = vmatpush1.msra.mxu0 %v550
        %653 = vmatprep.subr.mxu0 0.0
        %654 = vmatpush1.msra.mxu0 %v551
        %655 = vmatprep.subr.mxu0 0.0
        %656 = vmatpush1.msra.mxu0 %v552
        %657 = vmatprep.subr.mxu0 0.0
        %658 = vmatpush1.msra.mxu0 %v553
        %659 = vmatprep.subr.mxu0 0.0
        %660 = vmatpush1.msra.mxu0 %v554
        %661 = vmatprep.subr.mxu0 0.0
        %662 = vmatpush1.msra.mxu0 %v555
        %663 = vmatprep.subr.mxu0 0.0
        %664 = vmatpush1.msra.mxu0 %v556
        %665 = vmatprep.subr.mxu0 0.0
        %666 = vmatpush1.msra.mxu0 %v557
        %667 = vmatprep.subr.mxu0 0.0
        %668 = vmatpush1.msra.mxu0 %v558
        %669 = vmatprep.subr.mxu0 0.0
        %670 = vmatpush1.msra.mxu0 %v559
        %671 = vmatprep.subr.mxu0 0.0
        %672 = vmatpush1.msra.mxu0 %v560
        %673 = vmatprep.subr.mxu0 0.0
        %674 = vmatpush1.msra.mxu0 %v561
        %675 = vmatprep.subr.mxu0 0.0
        %676 = vmatpush1.msra.mxu0 %v562
        %677 = vmatprep.subr.mxu0 0.0
        %678 = vmatpush1.msra.mxu0 %v563
        %679 = vmatprep.subr.mxu0 0.0
        %680 = vmatpush1.msra.mxu0 %v564
        %681 = vmatprep.subr.mxu0 0.0
        %682 = vmatpush1.msra.mxu0 %v565
        %683 = vmatprep.subr.mxu0 0.0
        %684 = vmatpush1.msra.mxu0 %v566
        %685 = vmatprep.subr.mxu0 0.0
        %686 = vmatpush1.msra.mxu0 %v567
        %687 = vmatprep.subr.mxu0 0.0
        %688 = vmatpush1.msra.mxu0 %v568
        %689 = vmatprep.subr.mxu0 0.0
        %690 = vmatpush1.msra.mxu0 %v569
        %691 = vmatprep.subr.mxu0 0.0
        %692 = vmatpush1.msra.mxu0 %v570
        %693 = vmatprep.subr.mxu0 0.0
        %694 = vmatpush1.msra.mxu0 %v571
        %695 = vmatprep.subr.mxu0 0.0
        %696 = vmatpush1.msra.mxu0 %v572
        %697 = vmatprep.subr.mxu0 0.0
        %698 = vmatpush1.msra.mxu0 %v573
        %699 = vmatprep.subr.mxu0 0.0
        %700 = vmatpush1.msra.mxu0 %v574
        %701 = vmatprep.subr.mxu0 0.0
        %702 = vmatpush1.msra.mxu0 %v575
        %703 = vmatprep.subr.mxu0 0.0
        %704 = vmatpush1.msra.mxu0 %v576
        %705 = vmatprep.mubr.f32.mxu0 %v625
        %706 = vmatmul.mubr.f32.gmra.mrb[0].mxu0 %v593
        %v707 = vpop.f32.mrb[0].mxu0
        %v708 = vadd.f32 0.0, %v707
        %v709 = vpop.f32.mrb[0].mxu0
        %710 = vmatprep.mubr.f32.mxu0 %v626
        %711 = vmatmul.mubr.f32.gmra.mrb[0].mxu0 %v594
        %v712 = vpop.f32.mrb[0].mxu0
        %v713 = vadd.f32 0.0, %v712
        %v714 = vpop.f32.mrb[0].mxu0
        %715 = vmatprep.mubr.f32.mxu0 %v627
        %716 = vmatmul.mubr.f32.gmra.mrb[0].mxu0 %v595
        %v717 = vpop.f32.mrb[0].mxu0
        %v718 = vadd.f32 0.0, %v717
        %v719 = vpop.f32.mrb[0].mxu0
        %720 = vmatprep.mubr.f32.mxu0 %v628
        %721 = vmatmul.mubr.f32.gmra.mrb[0].mxu0 %v596
        %v722 = vpop.f32.mrb[0].mxu0
        %v723 = vadd.f32 0.0, %v722
        %v724 = vpop.f32.mrb[0].mxu0
        %725 = vdwg.mxu0
        %v726 = vsub.f32 0.0, %v347
        %v727 = vsub.f32 0.0, %v348
        %v728 = vsub.f32 0.0, %v349
        %v729 = vsub.f32 0.0, %v350
        %731 = vset.pattern.permute.xlu0 0
        %732 = vperm.xlu0 %731, %v726
        %v733 = vpop.permute.xlu0 %732
        %736 = vset.pattern.permute.xlu0 0
        %737 = vperm.xlu0 %736, %v727
        %v738 = vpop.permute.xlu0 %737
        %741 = vset.pattern.permute.xlu0 0
        %742 = vperm.xlu0 %741, %v728
        %v743 = vpop.permute.xlu0 %742
        %746 = vset.pattern.permute.xlu0 0
        %747 = vperm.xlu0 %746, %v729
        %v748 = vpop.permute.xlu0 %747
        %v751 = vlaneseq
        %v752 = vshrl.u32 %v751, 7
        %v753 = vsub.s32 0, %v752
        %v754 = vrot.slane %v384, %v753
        %v756 = vmul.f32 %v733, %v754
        %v757 = vmul.f32 %v738, %v754
        %v758 = vmul.f32 %v743, %v754
        %v759 = vmul.f32 %v748, %v754
        %v760 = vmul.f32 %v756, 1.442695
        %v761 = vpow.pop %v760
        %v762 = vmul.f32 %v757, 1.442695
        %v763 = vpow.pop %v762
        %v764 = vmul.f32 %v758, 1.442695
        %v765 = vpow.pop %v764
        %v766 = vmul.f32 %v759, 1.442695
        %v767 = vpow.pop %v766
        %v768 = vmul.f32 %v761, %v708
        %v769 = vmul.f32 %v763, %v713
        %v770 = vmul.f32 %v765, %v718
        %v771 = vmul.f32 %v767, %v723
        %vm772 = vcmask 261120
        %v774 = vsel %vm772, %v351, 0
        %v777 = vsel %vm772, %v352, 0
        %v780 = vsel %vm772, %v353, 0
        %v783 = vsel %vm772, %v354, 0
        %v786 = vsel %vm772, %v355, 0
        %v789 = vsel %vm772, %v356, 0
        %v792 = vsel %vm772, %v357, 0
        %v795 = vsel %vm772, %v358, 0
        %v798 = vsel %vm772, %v359, 0
        %v801 = vsel %vm772, %v360, 0
        %v804 = vsel %vm772, %v361, 0
        %v807 = vsel %vm772, %v362, 0
        %v810 = vsel %vm772, %v363, 0
        %v813 = vsel %vm772, %v364, 0
        %v816 = vsel %vm772, %v365, 0
        %v819 = vsel %vm772, %v366, 0
        %v822 = vsel %vm772, %v367, 0
        %v825 = vsel %vm772, %v368, 0
        %v828 = vsel %vm772, %v369, 0
        %v831 = vsel %vm772, %v370, 0
        %v834 = vsel %vm772, %v371, 0
        %v837 = vsel %vm772, %v372, 0
        %v840 = vsel %vm772, %v373, 0
        %v843 = vsel %vm772, %v374, 0
        %v846 = vsel %vm772, %v375, 0
        %v849 = vsel %vm772, %v376, 0
        %v852 = vsel %vm772, %v377, 0
        %v855 = vsel %vm772, %v378, 0
        %v858 = vsel %vm772, %v379, 0
        %v861 = vsel %vm772, %v380, 0
        %v864 = vsel %vm772, %v381, 0
        %v867 = vsel %vm772, %v382, 0
        %869 = vmatprep.subr.mxu0 0.0
        %870 = vmatpush1.msra.mxu0 %v768
        %871 = vmatprep.subr.mxu0 0.0
        %872 = vmatpush1.msra.mxu0 %v769
        %873 = vmatprep.subr.mxu0 0.0
        %874 = vmatpush1.msra.mxu0 %v770
        %875 = vmatprep.subr.mxu0 0.0
        %876 = vmatpush1.msra.mxu0 %v771
        %877 = vmatprep.subr.mxu0 0.0
        %878 = vmatpush1.msra.mxu0 0.0
        %879 = vmatprep.subr.mxu0 0.0
        %880 = vmatpush1.msra.mxu0 0.0
        %881 = vmatprep.subr.mxu0 0.0
        %882 = vmatpush1.msra.mxu0 0.0
        %883 = vmatprep.subr.mxu0 0.0
        %884 = vmatpush1.msra.mxu0 0.0
        %885 = vmatprep.subr.mxu0 0.0
        %886 = vmatpush1.msra.mxu0 0.0
        %887 = vmatprep.subr.mxu0 0.0
        %888 = vmatpush1.msra.mxu0 0.0
        %889 = vmatprep.subr.mxu0 0.0
        %890 = vmatpush1.msra.mxu0 0.0
        %891 = vmatprep.subr.mxu0 0.0
        %892 = vmatpush1.msra.mxu0 0.0
        %893 = vmatprep.subr.mxu0 0.0
        %894 = vmatpush1.msra.mxu0 0.0
        %895 = vmatprep.subr.mxu0 0.0
        %896 = vmatpush1.msra.mxu0 0.0
        %897 = vmatprep.subr.mxu0 0.0
        %898 = vmatpush1.msra.mxu0 0.0
        %899 = vmatprep.subr.mxu0 0.0
        %900 = vmatpush1.msra.mxu0 0.0
        %901 = vmatprep.subr.mxu0 0.0
        %902 = vmatpush1.msra.mxu0 0.0
        %903 = vmatprep.subr.mxu0 0.0
        %904 = vmatpush1.msra.mxu0 0.0
        %905 = vmatprep.subr.mxu0 0.0
        %906 = vmatpush1.msra.mxu0 0.0
        %907 = vmatprep.subr.mxu0 0.0
        %908 = vmatpush1.msra.mxu0 0.0
        %909 = vmatprep.subr.mxu0 0.0
        %910 = vmatpush1.msra.mxu0 0.0
        %911 = vmatprep.subr.mxu0 0.0
        %912 = vmatpush1.msra.mxu0 0.0
        %913 = vmatprep.subr.mxu0 0.0
        %914 = vmatpush1.msra.mxu0 0.0
        %915 = vmatprep.subr.mxu0 0.0
        %916 = vmatpush1.msra.mxu0 0.0
        %917 = vmatprep.subr.mxu0 0.0
        %918 = vmatpush1.msra.mxu0 0.0
        %919 = vmatprep.subr.mxu0 0.0
        %920 = vmatpush1.msra.mxu0 0.0
        %921 = vmatprep.subr.mxu0 0.0
        %922 = vmatpush1.msra.mxu0 0.0
        %923 = vmatprep.subr.mxu0 0.0
        %924 = vmatpush1.msra.mxu0 0.0
        %925 = vmatprep.subr.mxu0 0.0
        %926 = vmatpush1.msra.mxu0 0.0
        %927 = vmatprep.subr.mxu0 0.0
        %928 = vmatpush1.msra.mxu0 0.0
        %929 = vmatprep.subr.mxu0 0.0
        %930 = vmatpush1.msra.mxu0 0.0
        %931 = vmatprep.subr.mxu0 0.0
        %932 = vmatpush1.msra.mxu0 0.0
        %933 = vmatprep.mubr.f32.mxu0 0.0
        %934 = vmatmul.mubr.f32.gmra.mrb[0].mxu0 %v774
        %v935 = vpop.f32.mrb[0].mxu0
        %v936 = vadd.f32 0.0, %v935
        %v937 = vpop.f32.mrb[0].mxu0
        %938 = vmatprep.mubr.f32.mxu0 0.0
        %939 = vmatmul.mubr.f32.gmra.mrb[0].mxu0 %v777
        %v940 = vpop.f32.mrb[0].mxu0
        %v941 = vadd.f32 0.0, %v940
        %v942 = vpop.f32.mrb[0].mxu0
        %943 = vmatprep.mubr.f32.mxu0 0.0
        %944 = vmatmul.mubr.f32.gmra.mrb[0].mxu0 %v780
        %v945 = vpop.f32.mrb[0].mxu0
        %v946 = vadd.f32 0.0, %v945
        %v947 = vpop.f32.mrb[0].mxu0
        %948 = vmatprep.mubr.f32.mxu0 0.0
        %949 = vmatmul.mubr.f32.gmra.mrb[0].mxu0 %v783
        %v950 = vpop.f32.mrb[0].mxu0
        %v951 = vadd.f32 0.0, %v950
        %v952 = vpop.f32.mrb[0].mxu0
        %953 = vmatprep.mubr.f32.mxu0 0.0
        %954 = vmatmul.mubr.f32.gmra.mrb[0].mxu0 %v786
        %v955 = vpop.f32.mrb[0].mxu0
        %v956 = vadd.f32 0.0, %v955
        %v957 = vpop.f32.mrb[0].mxu0
        %958 = vmatprep.mubr.f32.mxu0 0.0
        %959 = vmatmul.mubr.f32.gmra.mrb[0].mxu0 %v789
        %v960 = vpop.f32.mrb[0].mxu0
        %v961 = vadd.f32 0.0, %v960
        %v962 = vpop.f32.mrb[0].mxu0
        %963 = vmatprep.mubr.f32.mxu0 0.0
        %964 = vmatmul.mubr.f32.gmra.mrb[0].mxu0 %v792
        %v965 = vpop.f32.mrb[0].mxu0
        %v966 = vadd.f32 0.0, %v965
        %v967 = vpop.f32.mrb[0].mxu0
        %968 = vmatprep.mubr.f32.mxu0 0.0
        %969 = vmatmul.mubr.f32.gmra.mrb[0].mxu0 %v795
        %v970 = vpop.f32.mrb[0].mxu0
        %v971 = vadd.f32 0.0, %v970
        %v972 = vpop.f32.mrb[0].mxu0
        %973 = vmatprep.mubr.f32.mxu0 0.0
        %974 = vmatmul.mubr.f32.gmra.mrb[0].mxu0 %v798
        %v975 = vpop.f32.mrb[0].mxu0
        %v976 = vadd.f32 0.0, %v975
        %v977 = vpop.f32.mrb[0].mxu0
        %978 = vmatprep.mubr.f32.mxu0 0.0
        %979 = vmatmul.mubr.f32.gmra.mrb[0].mxu0 %v801
        %v980 = vpop.f32.mrb[0].mxu0
        %v981 = vadd.f32 0.0, %v980
        %v982 = vpop.f32.mrb[0].mxu0
        %983 = vmatprep.mubr.f32.mxu0 0.0
        %984 = vmatmul.mubr.f32.gmra.mrb[0].mxu0 %v804
        %v985 = vpop.f32.mrb[0].mxu0
        %v986 = vadd.f32 0.0, %v985
        %v987 = vpop.f32.mrb[0].mxu0
        %988 = vmatprep.mubr.f32.mxu0 0.0
        %989 = vmatmul.mubr.f32.gmra.mrb[0].mxu0 %v807
        %v990 = vpop.f32.mrb[0].mxu0
        %v991 = vadd.f32 0.0, %v990
        %v992 = vpop.f32.mrb[0].mxu0
        %993 = vmatprep.mubr.f32.mxu0 0.0
        %994 = vmatmul.mubr.f32.gmra.mrb[0].mxu0 %v810
        %v995 = vpop.f32.mrb[0].mxu0
        %v996 = vadd.f32 0.0, %v995
        %v997 = vpop.f32.mrb[0].mxu0
        %998 = vmatprep.mubr.f32.mxu0 0.0
        %999 = vmatmul.mubr.f32.gmra.mrb[0].mxu0 %v813
        %v1000 = vpop.f32.mrb[0].mxu0
        %v1001 = vadd.f32 0.0, %v1000
        %v1002 = vpop.f32.mrb[0].mxu0
        %1003 = vmatprep.mubr.f32.mxu0 0.0
        %1004 = vmatmul.mubr.f32.gmra.mrb[0].mxu0 %v816
        %v1005 = vpop.f32.mrb[0].mxu0
        %v1006 = vadd.f32 0.0, %v1005
        %v1007 = vpop.f32.mrb[0].mxu0
        %1008 = vmatprep.mubr.f32.mxu0 0.0
        %1009 = vmatmul.mubr.f32.gmra.mrb[0].mxu0 %v819
        %v1010 = vpop.f32.mrb[0].mxu0
        %v1011 = vadd.f32 0.0, %v1010
        %v1012 = vpop.f32.mrb[0].mxu0
        %1013 = vmatprep.mubr.f32.mxu0 0.0
        %1014 = vmatmul.mubr.f32.gmra.mrb[0].mxu0 %v822
        %v1015 = vpop.f32.mrb[0].mxu0
        %v1016 = vadd.f32 0.0, %v1015
        %v1017 = vpop.f32.mrb[0].mxu0
        %1018 = vmatprep.mubr.f32.mxu0 0.0
        %1019 = vmatmul.mubr.f32.gmra.mrb[0].mxu0 %v825
        %v1020 = vpop.f32.mrb[0].mxu0
        %v1021 = vadd.f32 0.0, %v1020
        %v1022 = vpop.f32.mrb[0].mxu0
        %1023 = vmatprep.mubr.f32.mxu0 0.0
        %1024 = vmatmul.mubr.f32.gmra.mrb[0].mxu0 %v828
        %v1025 = vpop.f32.mrb[0].mxu0
        %v1026 = vadd.f32 0.0, %v1025
        %v1027 = vpop.f32.mrb[0].mxu0
        %1028 = vmatprep.mubr.f32.mxu0 0.0
        %1029 = vmatmul.mubr.f32.gmra.mrb[0].mxu0 %v831
        %v1030 = vpop.f32.mrb[0].mxu0
        %v1031 = vadd.f32 0.0, %v1030
        %v1032 = vpop.f32.mrb[0].mxu0
        %1033 = vmatprep.mubr.f32.mxu0 0.0
        %1034 = vmatmul.mubr.f32.gmra.mrb[0].mxu0 %v834
        %v1035 = vpop.f32.mrb[0].mxu0
        %v1036 = vadd.f32 0.0, %v1035
        %v1037 = vpop.f32.mrb[0].mxu0
        %1038 = vmatprep.mubr.f32.mxu0 0.0
        %1039 = vmatmul.mubr.f32.gmra.mrb[0].mxu0 %v837
        %v1040 = vpop.f32.mrb[0].mxu0
        %v1041 = vadd.f32 0.0, %v1040
        %v1042 = vpop.f32.mrb[0].mxu0
        %1043 = vmatprep.mubr.f32.mxu0 0.0
        %1044 = vmatmul.mubr.f32.gmra.mrb[0].mxu0 %v840
        %v1045 = vpop.f32.mrb[0].mxu0
        %v1046 = vadd.f32 0.0, %v1045
        %v1047 = vpop.f32.mrb[0].mxu0
        %1048 = vmatprep.mubr.f32.mxu0 0.0
        %1049 = vmatmul.mubr.f32.gmra.mrb[0].mxu0 %v843
        %v1050 = vpop.f32.mrb[0].mxu0
        %v1051 = vadd.f32 0.0, %v1050
        %v1052 = vpop.f32.mrb[0].mxu0
        %1053 = vmatprep.mubr.f32.mxu0 0.0
        %1054 = vmatmul.mubr.f32.gmra.mrb[0].mxu0 %v846
        %v1055 = vpop.f32.mrb[0].mxu0
        %v1056 = vadd.f32 0.0, %v1055
        %v1057 = vpop.f32.mrb[0].mxu0
        %1058 = vmatprep.mubr.f32.mxu0 0.0
        %1059 = vmatmul.mubr.f32.gmra.mrb[0].mxu0 %v849
        %v1060 = vpop.f32.mrb[0].mxu0
        %v1061 = vadd.f32 0.0, %v1060
        %v1062 = vpop.f32.mrb[0].mxu0
        %1063 = vmatprep.mubr.f32.mxu0 0.0
        %1064 = vmatmul.mubr.f32.gmra.mrb[0].mxu0 %v852
        %v1065 = vpop.f32.mrb[0].mxu0
        %v1066 = vadd.f32 0.0, %v1065
        %v1067 = vpop.f32.mrb[0].mxu0
        %1068 = vmatprep.mubr.f32.mxu0 0.0
        %1069 = vmatmul.mubr.f32.gmra.mrb[0].mxu0 %v855
        %v1070 = vpop.f32.mrb[0].mxu0
        %v1071 = vadd.f32 0.0, %v1070
        %v1072 = vpop.f32.mrb[0].mxu0
        %1073 = vmatprep.mubr.f32.mxu0 0.0
        %1074 = vmatmul.mubr.f32.gmra.mrb[0].mxu0 %v858
        %v1075 = vpop.f32.mrb[0].mxu0
        %v1076 = vadd.f32 0.0, %v1075
        %v1077 = vpop.f32.mrb[0].mxu0
        %1078 = vmatprep.mubr.f32.mxu0 0.0
        %1079 = vmatmul.mubr.f32.gmra.mrb[0].mxu0 %v861
        %v1080 = vpop.f32.mrb[0].mxu0
        %v1081 = vadd.f32 0.0, %v1080
        %v1082 = vpop.f32.mrb[0].mxu0
        %1083 = vmatprep.mubr.f32.mxu0 0.0
        %1084 = vmatmul.mubr.f32.gmra.mrb[0].mxu0 %v864
        %v1085 = vpop.f32.mrb[0].mxu0
        %v1086 = vadd.f32 0.0, %v1085
        %v1087 = vpop.f32.mrb[0].mxu0
        %1088 = vmatprep.mubr.f32.mxu0 0.0
        %1089 = vmatmul.mubr.f32.gmra.mrb[0].mxu0 %v867
        %v1090 = vpop.f32.mrb[0].mxu0
        %v1091 = vadd.f32 0.0, %v1090
        %v1092 = vpop.f32.mrb[0].mxu0
        %1093 = vdwg.mxu0
        %v1094 = vpack.c.bf16 %v941, %v936
        %v1095 = vpack.c.bf16 %v951, %v946
        %v1096 = vpack.c.bf16 %v961, %v956
        %v1097 = vpack.c.bf16 %v971, %v966
        %v1098 = vpack.c.bf16 %v981, %v976
        %v1099 = vpack.c.bf16 %v991, %v986
        %v1100 = vpack.c.bf16 %v1001, %v996
        %v1101 = vpack.c.bf16 %v1011, %v1006
        %v1102 = vpack.c.bf16 %v1021, %v1016
        %v1103 = vpack.c.bf16 %v1031, %v1026
        %v1104 = vpack.c.bf16 %v1041, %v1036
        %v1105 = vpack.c.bf16 %v1051, %v1046
        %v1106 = vpack.c.bf16 %v1061, %v1056
        %v1107 = vpack.c.bf16 %v1071, %v1066
        %v1108 = vpack.c.bf16 %v1081, %v1076
        %v1109 = vpack.c.bf16 %v1091, %v1086
        %v1126 = vunpack.c.l.b16 %v1094
        %v1127 = vunpack.c.h.b16 %v1094
        %v1128 = vunpack.c.l.b16 %v1095
        %v1129 = vunpack.c.h.b16 %v1095
        %v1130 = vunpack.c.l.b16 %v1096
        %v1131 = vunpack.c.h.b16 %v1096
        %v1132 = vunpack.c.l.b16 %v1097
        %v1133 = vunpack.c.h.b16 %v1097
        %v1134 = vunpack.c.l.b16 %v1098
        %v1135 = vunpack.c.h.b16 %v1098
        %v1136 = vunpack.c.l.b16 %v1099
        %v1137 = vunpack.c.h.b16 %v1099
        %v1138 = vunpack.c.l.b16 %v1100
        %v1139 = vunpack.c.h.b16 %v1100
        %v1140 = vunpack.c.l.b16 %v1101
        %v1141 = vunpack.c.h.b16 %v1101
        %v1142 = vunpack.c.l.b16 %v1102
        %v1143 = vunpack.c.h.b16 %v1102
        %v1144 = vunpack.c.l.b16 %v1103
        %v1145 = vunpack.c.h.b16 %v1103
        %v1146 = vunpack.c.l.b16 %v1104
        %v1147 = vunpack.c.h.b16 %v1104
        %v1148 = vunpack.c.l.b16 %v1105
        %v1149 = vunpack.c.h.b16 %v1105
        %v1150 = vunpack.c.l.b16 %v1106
        %v1151 = vunpack.c.h.b16 %v1106
        %v1152 = vunpack.c.l.b16 %v1107
        %v1153 = vunpack.c.h.b16 %v1107
        %v1154 = vunpack.c.l.b16 %v1108
        %v1155 = vunpack.c.h.b16 %v1108
        %v1156 = vunpack.c.l.b16 %v1109
        %v1157 = vunpack.c.h.b16 %v1109
        %v1158 = vpack.c.b16 %v1126, %v1126
        %v1159 = vpack.c.b16 %v1127, %v1127
        %v1160 = vpack.c.b16 %v1128, %v1128
        %v1161 = vpack.c.b16 %v1129, %v1129
        %v1162 = vpack.c.b16 %v1130, %v1130
        %v1163 = vpack.c.b16 %v1131, %v1131
        %v1164 = vpack.c.b16 %v1132, %v1132
        %v1165 = vpack.c.b16 %v1133, %v1133
        %v1166 = vpack.c.b16 %v1134, %v1134
        %v1167 = vpack.c.b16 %v1135, %v1135
        %v1168 = vpack.c.b16 %v1136, %v1136
        %v1169 = vpack.c.b16 %v1137, %v1137
        %v1170 = vpack.c.b16 %v1138, %v1138
        %v1171 = vpack.c.b16 %v1139, %v1139
        %v1172 = vpack.c.b16 %v1140, %v1140
        %v1173 = vpack.c.b16 %v1141, %v1141
        %v1174 = vpack.c.b16 %v1142, %v1142
        %v1175 = vpack.c.b16 %v1143, %v1143
        %v1176 = vpack.c.b16 %v1144, %v1144
        %v1177 = vpack.c.b16 %v1145, %v1145
        %v1178 = vpack.c.b16 %v1146, %v1146
        %v1179 = vpack.c.b16 %v1147, %v1147
        %v1180 = vpack.c.b16 %v1148, %v1148
        %v1181 = vpack.c.b16 %v1149, %v1149
        %v1182 = vpack.c.b16 %v1150, %v1150
        %v1183 = vpack.c.b16 %v1151, %v1151
        %v1184 = vpack.c.b16 %v1152, %v1152
        %v1185 = vpack.c.b16 %v1153, %v1153
        %v1186 = vpack.c.b16 %v1154, %v1154
        %v1187 = vpack.c.b16 %v1155, %v1155
        %v1188 = vpack.c.b16 %v1156, %v1156
        %v1189 = vpack.c.b16 %v1157, %v1157
        %1222 = vst [vmem:[%s262] sm:$0xf] %v1158
        %1223 = vst [vmem:[%s262 + $0x4] sm:$0xf] %v1159
        %1224 = vst [vmem:[%s262 + $0x8] sm:$0xf] %v1160
        %1225 = vst [vmem:[%s262 + $0xc] sm:$0xf] %v1161
        %1226 = vst [vmem:[%s262 + $0x10] sm:$0xf] %v1162
        %1227 = vst [vmem:[%s262 + $0x14] sm:$0xf] %v1163
        %1228 = vst [vmem:[%s262 + $0x18] sm:$0xf] %v1164
        %1229 = vst [vmem:[%s262 + $0x1c] sm:$0xf] %v1165
        %1230 = vst [vmem:[%s262 + $0x20] sm:$0xf] %v1166
        %1231 = vst [vmem:[%s262 + $0x24] sm:$0xf] %v1167
        %1232 = vst [vmem:[%s262 + $0x28] sm:$0xf] %v1168
        %1233 = vst [vmem:[%s262 + $0x2c] sm:$0xf] %v1169
        %1234 = vst [vmem:[%s262 + $0x30] sm:$0xf] %v1170
        %1235 = vst [vmem:[%s262 + $0x34] sm:$0xf] %v1171
        %1236 = vst [vmem:[%s262 + $0x38] sm:$0xf] %v1172
        %1237 = vst [vmem:[%s262 + $0x3c] sm:$0xf] %v1173
        %1238 = vst [vmem:[%s262 + $0x40] sm:$0xf] %v1174
        %1239 = vst [vmem:[%s262 + $0x44] sm:$0xf] %v1175
        %1240 = vst [vmem:[%s262 + $0x48] sm:$0xf] %v1176
        %1241 = vst [vmem:[%s262 + $0x4c] sm:$0xf] %v1177
        %1242 = vst [vmem:[%s262 + $0x50] sm:$0xf] %v1178
        %1243 = vst [vmem:[%s262 + $0x54] sm:$0xf] %v1179
        %1244 = vst [vmem:[%s262 + $0x58] sm:$0xf] %v1180
        %1245 = vst [vmem:[%s262 + $0x5c] sm:$0xf] %v1181
        %1246 = vst [vmem:[%s262 + $0x60] sm:$0xf] %v1182
        %1247 = vst [vmem:[%s262 + $0x64] sm:$0xf] %v1183
        %1248 = vst [vmem:[%s262 + $0x68] sm:$0xf] %v1184
        %1249 = vst [vmem:[%s262 + $0x6c] sm:$0xf] %v1185
        %1250 = vst [vmem:[%s262 + $0x70] sm:$0xf] %v1186
        %1251 = vst [vmem:[%s262 + $0x74] sm:$0xf] %v1187
        %1252 = vst [vmem:[%s262 + $0x78] sm:$0xf] %v1188
        %1253 = vst [vmem:[%s262 + $0x7c] sm:$0xf] %v1189
        %s1254 = sand.u32 %s152, 1
        %s1255 = scalar_lea.sflag [#allocation3], %s1254
        %s1256 = sand.u32 %s152, 1
        %s1257 = smul.addr %s1256, 128
        %s1258 = scalar_lea.vmem [#allocation2], %s1257
        // Predicated region
        $region41: #{tpu_custom_call.1} parent=39 // pred_check
          %p1259 = pneg %p162
        $region42: #{tpu_custom_call.1} parent=39 // pred_check_branch
          %1261 = sbr.rel (%p1259) target = $region44
        $region43: #{tpu_custom_call.1} parent=39 // pred_region
          %s1263 = ssub.s32 2048, 2048
          %1264 = vsyncadd %s1255, %s1263
          %s1265 = smul.addr %s19, 32
          %s1266 = smul.addr %s1265, 64
          %s1267 = scalar_lea.hbm %s5, %s1266
          %s1268 = sshll.u32 %s1258, 4
          %s1269 = int_to_ptr.vmem [resolvable:$true] %s1268
          %1274 = dma.vmem_to_hbm [thread:$0]  %s1269, 2048, %s1267, %s1255, 64, 64, 4
        $region44: #{tpu_custom_call.1} parent=39 // pred_fallthru
          _
      $region40: #{tpu_custom_call.1} parent=5 // pred_fallthru
        _
      %p1275 = scmp.le.s32.totalorder 2, %s14
      // Predicated region
      $region45: #{tpu_custom_call.1} parent=5 // pred_check
        %p1276 = pneg %p1275
      $region46: #{tpu_custom_call.1} parent=5 // pred_check_branch
        %1278 = sbr.rel (%p1276) target = $region48
      $region47: #{tpu_custom_call.1} parent=5 // pred_region
        %s1279 = ssub.s32 %s14, 2
        // Predicated region
        $region49: #{tpu_custom_call.1} parent=47 // pred_check
          %p1280 = pneg %p168
        $region50: #{tpu_custom_call.1} parent=47 // pred_check_branch
          %1282 = sbr.rel (%p1280) target = $region52
        $region51: #{tpu_custom_call.1} parent=47 // pred_region
          %s1283 = sand.u32 %s153, 1
          %s1284 = scalar_lea.sflag [#allocation3], %s1283
          %s1285 = sand.u32 %s153, 1
          %s1286 = smul.addr %s1285, 128
          %s1287 = scalar_lea.vmem [#allocation2], %s1286
          %1288 = dma.done %s1284, 2048
        $region52: #{tpu_custom_call.1} parent=47 // pred_fallthru
          _
      $region48: #{tpu_custom_call.1} parent=5 // pred_fallthru
        _
    $region6: #{tpu_custom_call.1} parent=1 // loop_footer
      %s18 = sadd.s32 1, %s14
    $region7: #{tpu_custom_call.1} parent=1 // loop_footer_branch
      %13 = sbr.rel target = $region3
    $region8: #{tpu_custom_call.1} parent=1 // loop_exit
      _
    %1289 = vsyncpa [#allocation3], 1
    %s1290 = scalar_lea.sflag [#allocation3], 1
    %1291 = vsyncpa %s1290, 1

</llo_original>
